<compile_context>
chip_gen: v5e
topology: v5e:2x2
jax: 0.10.0
libtpu: 0.0.40
codegen_flags: <defaults>
</compile_context>

<pallas_src>
import jax
import jax.numpy as jnp
from jax import lax
from jax.experimental import pallas as pl
from jax.experimental.pallas import tpu as pltpu

_LANE = 128            # lane width of a vreg
_MAX_TILE_B = 32768    # batch tile (on lanes); (32768, 16) f32 input block = 2 MiB


def _round_up(x, m):
    return ((x + m - 1) // m) * m


def _select_tile_b(B):
    """Pick the batch tile: big tiles, even #steps for megacore, small padding."""
    if B <= _LANE:
        # Single block exactly equal to the array dims: no partial blocks at all.
        return B
    n_tiles = pl.cdiv(B, _MAX_TILE_B)
    if B > 2 * _LANE:
        # v7x: >= 2 grid steps (even) so both TensorCores get work.
        n_tiles = max(n_tiles, 2)
        if n_tiles % 2:
            n_tiles += 1
    tile_b = _round_up(pl.cdiv(B, n_tiles), _LANE)
    return min(tile_b, _MAX_TILE_B)


def _mlp_kernel(x_ref, w1_ref, b1_ref, w2_ref, b2_ref, w3_ref, b3_ref, o_ref):
    # x_ref is (TILE_B, d_in) in natural layout.  The first dot_general
    # contracts dim 1 of W1 (d_in) with dim 1 of x (d_in), producing the
    # lane-dense transposed activation h1 = W1 @ x^T of shape (2n, TILE_B).
    # Weights are PyTorch (out, in); biases are (out, 1) columns so the VPU
    # add broadcasts over the lane (batch) axis.
    h1 = lax.dot_general(
        w1_ref[...], x_ref[...],
        dimension_numbers=(((1,), (1,)), ((), ())),
        preferred_element_type=jnp.float32,
    ) + b1_ref[...]
    # LeakyReLU(0.1)   (Dropout -> identity in eval mode)
    h1 = jnp.maximum(h1, 0.1 * h1)

    # Linear 2 + LeakyReLU(0.1)   (Dropout -> identity in eval mode)
    h2 = jnp.dot(w2_ref[...], h1, preferred_element_type=jnp.float32) + b2_ref[...]
    h2 = jnp.maximum(h2, 0.1 * h2)

    # Linear 3 (logits, 2 classes) -- output block (2, TILE_B) is lane-dense.
    o_ref[...] = (
        jnp.dot(w3_ref[...], h2, preferred_element_type=jnp.float32) + b3_ref[...]
    )


def bag_distribution_forward(x, params, tile_b=None):
    """x: (B, 2*n_slices) f32.  params: PyTorch-layout weights/biases."""
    w1, b1, w2, b2, w3, b3 = (
        params["w1"], params["b1"], params["w2"],
        params["b2"], params["w3"], params["b3"],
    )
    B, d_in = x.shape
    n_out = w3.shape[0]

    if tile_b is None:
        tile_b = _select_tile_b(B)

    # Biases as (out, 1) columns -> broadcast over lanes inside the kernel.
    b1c = b1.reshape(-1, 1)
    b2c = b2.reshape(-1, 1)
    b3c = b3.reshape(-1, 1)

    grid = (pl.cdiv(B, tile_b),)

    in_specs = [
        # Streamed input in natural (B, d_in) layout: one batch tile per step.
        pl.BlockSpec((tile_b, d_in), lambda i: (i, 0)),
        # Weights / biases: constant index_map -> VMEM-resident across steps.
        pl.BlockSpec(w1.shape, lambda i: (0, 0)),
        pl.BlockSpec(b1c.shape, lambda i: (0, 0)),
        pl.BlockSpec(w2.shape, lambda i: (0, 0)),
        pl.BlockSpec(b2c.shape, lambda i: (0, 0)),
        pl.BlockSpec(w3.shape, lambda i: (0, 0)),
        pl.BlockSpec(b3c.shape, lambda i: (0, 0)),
    ]
    out_specs = pl.BlockSpec((n_out, tile_b), lambda i: (0, i))

    out_t = pl.pallas_call(
        _mlp_kernel,
        out_shape=jax.ShapeDtypeStruct((n_out, B), jnp.float32),
        grid=grid,
        in_specs=in_specs,
        out_specs=out_specs,
        compiler_params=pltpu.CompilerParams(
            dimension_semantics=("parallel",),   # shard batch tiles across TCs (v7x)
        ),
    )(x, w1, b1c, w2, b2c, w3, b3c)

    # Un-transpose exactly (2, B) -- no padded columns exist.
    return out_t.T


def init_params(key, n_slices):
    """Deterministic init mimicking nn.Linear: W is PyTorch (out, in), b is (out,)."""
    d_in = n_slices * 2
    dims = [(d_in, d_in), (d_in, n_slices), (n_slices, 2)]
    params = {}
    for i, (din, dout) in enumerate(dims, start=1):
        key, kw, kb = jax.random.split(key, 3)
        bound = float(din) ** -0.5
        params[f"w{i}"] = jax.random.uniform(kw, (dout, din), jnp.float32, -bound, bound)
        params[f"b{i}"] = jax.random.uniform(kb, (dout,), jnp.float32, -bound, bound)
    return params


def _reference(x, params):
    """Pure-JAX reference of the same forward pass (eval-mode dropout)."""
    h = x @ params["w1"].T + params["b1"]
    h = jnp.where(h > 0, h, 0.1 * h)
    h = h @ params["w2"].T + params["b2"]
    h = jnp.where(h > 0, h, 0.1 * h)
    return h @ params["w3"].T + params["b3"]


if __name__ == "__main__":
    n_slices = 8           # -> input dim 16, hidden dims 16 / 8, output dim 2
    batch = 2

    key = jax.random.PRNGKey(0)
    key, kx = jax.random.split(key)
    x = jax.random.normal(kx, (batch, n_slices * 2), jnp.float32)

    params = init_params(key, n_slices)

    out = bag_distribution_forward(x, params)
    out = jax.block_until_ready(out)

    ref = _reference(x, params)
    assert out.shape == (batch, 2), out.shape
    assert jnp.allclose(out, ref, atol=1e-5, rtol=1e-5), (
        "Pallas kernel output mismatch vs reference"
    )
    print("KERNEL_OK")
</pallas_src>

<mosaic_0001>
module attributes {stable_mosaic.version = 11 : i64} {
  func.func @_mlp_kernel(%arg0: i32, %arg1: memref<2x16xf32, #tpu.memory_space<vmem>>, %arg2: memref<16x16xf32, #tpu.memory_space<vmem>>, %arg3: memref<16x1xf32, #tpu.memory_space<vmem>>, %arg4: memref<8x16xf32, #tpu.memory_space<vmem>>, %arg5: memref<8x1xf32, #tpu.memory_space<vmem>>, %arg6: memref<2x8xf32, #tpu.memory_space<vmem>>, %arg7: memref<2x1xf32, #tpu.memory_space<vmem>>, %arg8: memref<2x2xf32, #tpu.memory_space<vmem>>) attributes {dimension_semantics = [#tpu.dimension_semantics<parallel>], iteration_bounds = array<i64: 1>, scalar_prefetch = 0 : i64, scratch_operands = 0 : i64, tpu.core_type = #tpu.core_type<tc>, window_params = [{transform_indices = @transform_0, window_bounds = array<i64: 2, 16>}, {pipeline_mode = #tpu.pipeline_mode<synchronous>, transform_indices = @transform_1, window_bounds = array<i64: 16, 16>}, {pipeline_mode = #tpu.pipeline_mode<synchronous>, transform_indices = @transform_2, window_bounds = array<i64: 16, 1>}, {pipeline_mode = #tpu.pipeline_mode<synchronous>, transform_indices = @transform_3, window_bounds = array<i64: 8, 16>}, {pipeline_mode = #tpu.pipeline_mode<synchronous>, transform_indices = @transform_4, window_bounds = array<i64: 8, 1>}, {pipeline_mode = #tpu.pipeline_mode<synchronous>, transform_indices = @transform_5, window_bounds = array<i64: 2, 8>}, {pipeline_mode = #tpu.pipeline_mode<synchronous>, transform_indices = @transform_6, window_bounds = array<i64: 2, 1>}, {transform_indices = @transform_7, window_bounds = array<i64: 2, 2>}]} {
    %c0 = arith.constant 0 : index
    %c0_0 = arith.constant 0 : index
    %0 = vector.load %arg2[%c0, %c0_0] : memref<16x16xf32, #tpu.memory_space<vmem>>, vector<16x16xf32>
    %c0_1 = arith.constant 0 : index
    %c0_2 = arith.constant 0 : index
    %1 = vector.load %arg1[%c0_1, %c0_2] : memref<2x16xf32, #tpu.memory_space<vmem>>, vector<2x16xf32>
    %cst = arith.constant dense<0.000000e+00> : vector<16x2xf32>
    %2 = tpu.matmul %0, %1, %cst {dimension_numbers = #tpu.dot_dimension_numbers<[1], [1], [0], [0], [0, 0, 1, 0], [], []>} : vector<16x16xf32>, vector<2x16xf32>, vector<16x2xf32> -> vector<16x2xf32>
    %c0_3 = arith.constant 0 : index
    %c0_4 = arith.constant 0 : index
    %3 = vector.load %arg3[%c0_3, %c0_4] : memref<16x1xf32, #tpu.memory_space<vmem>>, vector<16x1xf32>
    %4 = vector.broadcast %3 : vector<16x1xf32> to vector<16x2xf32>
    %5 = arith.addf %2, %4 : vector<16x2xf32>
    %cst_5 = arith.constant 1.000000e-01 : f32
    %6 = vector.broadcast %cst_5 : f32 to vector<16x2xf32>
    %7 = arith.mulf %6, %5 : vector<16x2xf32>
    %8 = arith.maximumf %5, %7 : vector<16x2xf32>
    %c0_6 = arith.constant 0 : index
    %c0_7 = arith.constant 0 : index
    %9 = vector.load %arg4[%c0_6, %c0_7] : memref<8x16xf32, #tpu.memory_space<vmem>>, vector<8x16xf32>
    %cst_8 = arith.constant dense<0.000000e+00> : vector<8x2xf32>
    %10 = tpu.matmul %9, %8, %cst_8 {dimension_numbers = #tpu.dot_dimension_numbers<[1], [0], [0], [1], [0, 0, 1, 1], [], []>} : vector<8x16xf32>, vector<16x2xf32>, vector<8x2xf32> -> vector<8x2xf32>
    %c0_9 = arith.constant 0 : index
    %c0_10 = arith.constant 0 : index
    %11 = vector.load %arg5[%c0_9, %c0_10] : memref<8x1xf32, #tpu.memory_space<vmem>>, vector<8x1xf32>
    %12 = vector.broadcast %11 : vector<8x1xf32> to vector<8x2xf32>
    %13 = arith.addf %10, %12 : vector<8x2xf32>
    %cst_11 = arith.constant 1.000000e-01 : f32
    %14 = vector.broadcast %cst_11 : f32 to vector<8x2xf32>
    %15 = arith.mulf %14, %13 : vector<8x2xf32>
    %16 = arith.maximumf %13, %15 : vector<8x2xf32>
    %c0_12 = arith.constant 0 : index
    %c0_13 = arith.constant 0 : index
    %17 = vector.load %arg6[%c0_12, %c0_13] : memref<2x8xf32, #tpu.memory_space<vmem>>, vector<2x8xf32>
    %cst_14 = arith.constant dense<0.000000e+00> : vector<2x2xf32>
    %18 = tpu.matmul %17, %16, %cst_14 {dimension_numbers = #tpu.dot_dimension_numbers<[1], [0], [0], [1], [0, 0, 1, 1], [], []>} : vector<2x8xf32>, vector<8x2xf32>, vector<2x2xf32> -> vector<2x2xf32>
    %c0_15 = arith.constant 0 : index
    %c0_16 = arith.constant 0 : index
    %19 = vector.load %arg7[%c0_15, %c0_16] : memref<2x1xf32, #tpu.memory_space<vmem>>, vector<2x1xf32>
    %20 = vector.broadcast %19 : vector<2x1xf32> to vector<2x2xf32>
    %21 = arith.addf %18, %20 : vector<2x2xf32>
    %c0_17 = arith.constant 0 : index
    %c0_18 = arith.constant 0 : index
    %22 = vector.load %arg8[%c0_17, %c0_18] : memref<2x2xf32, #tpu.memory_space<vmem>>, vector<2x2xf32>
    tpu.vector_store %arg8[%c0_17, %c0_18], %21 {strides = array<i32>} : memref<2x2xf32, #tpu.memory_space<vmem>>, vector<2x2xf32>,
    return
  }
  func.func @transform_0(%arg0: i32) -> (i32, i32) {
    %c0_i32 = arith.constant 0 : i32
    %c0_i32_0 = arith.constant 0 : i32
    return %arg0, %c0_i32 : i32, i32
  }
  func.func @transform_1(%arg0: i32) -> (i32, i32) {
    %c0_i32 = arith.constant 0 : i32
    %c0_i32_0 = arith.constant 0 : i32
    %c0_i32_1 = arith.constant 0 : i32
    return %c0_i32, %c0_i32_0 : i32, i32
  }
  func.func @transform_2(%arg0: i32) -> (i32, i32) {
    %c0_i32 = arith.constant 0 : i32
    %c0_i32_0 = arith.constant 0 : i32
    %c0_i32_1 = arith.constant 0 : i32
    return %c0_i32, %c0_i32_0 : i32, i32
  }
  func.func @transform_3(%arg0: i32) -> (i32, i32) {
    %c0_i32 = arith.constant 0 : i32
    %c0_i32_0 = arith.constant 0 : i32
    %c0_i32_1 = arith.constant 0 : i32
    return %c0_i32, %c0_i32_0 : i32, i32
  }
  func.func @transform_4(%arg0: i32) -> (i32, i32) {
    %c0_i32 = arith.constant 0 : i32
    %c0_i32_0 = arith.constant 0 : i32
    %c0_i32_1 = arith.constant 0 : i32
    return %c0_i32, %c0_i32_0 : i32, i32
  }
  func.func @transform_5(%arg0: i32) -> (i32, i32) {
    %c0_i32 = arith.constant 0 : i32
    %c0_i32_0 = arith.constant 0 : i32
    %c0_i32_1 = arith.constant 0 : i32
    return %c0_i32, %c0_i32_0 : i32, i32
  }
  func.func @transform_6(%arg0: i32) -> (i32, i32) {
    %c0_i32 = arith.constant 0 : i32
    %c0_i32_0 = arith.constant 0 : i32
    %c0_i32_1 = arith.constant 0 : i32
    return %c0_i32, %c0_i32_0 : i32, i32
  }
  func.func @transform_7(%arg0: i32) -> (i32, i32) {
    %c0_i32 = arith.constant 0 : i32
    %c0_i32_0 = arith.constant 0 : i32
    return %c0_i32, %arg0 : i32, i32
  }
}

</mosaic_0001>

<llo_original>
// kernel: tpu_custom_call.1
$region0: #{tpu_custom_call.1}
  #allocation0 [shape = 'u32[]', space=smem, size = 0x4, offset = 0x4, fixed_abs, tag = 'smem constant byte address 0x4 - core index']
  #allocation1 [shape = 'u32[72,128]{1,0:T(1,128)}', space=vmem, size = 0x9000, scoped, tag = 'internal scratch']
  %s0 = inlined_call_operand.vmem [shape: f32[2,16], index: 0, kind: input, shape index: {}]
  %s1 = inlined_call_operand.vmem [shape: f32[16,16], index: 1, kind: input, shape index: {}]
  %s2 = inlined_call_operand.vmem [shape: f32[16,1], index: 2, kind: input, shape index: {}]
  %s3 = inlined_call_operand.vmem [shape: f32[8,16], index: 3, kind: input, shape index: {}]
  %s4 = inlined_call_operand.vmem [shape: f32[8,1], index: 4, kind: input, shape index: {}]
  %s5 = inlined_call_operand.vmem [shape: f32[2,8], index: 5, kind: input, shape index: {}]
  %s6 = inlined_call_operand.vmem [shape: f32[2,1], index: 6, kind: input, shape index: {}]
  %s7 = inlined_call_operand.hbm [shape: f32[2,2], index: 7, kind: output, shape index: {}]
  %s8 = sld [smem:[#allocation0]]
  $region38: #{tpu_custom_call.1} parent=0
    _
  %s10 = ssub.s32 1, %s8
  %s11 = scalar_select 0, %s10, %s8
  $region1: #{tpu_custom_call.1} parent=0
    #allocation2 [shape = 'u8[1024]{0}', space=vmem, size = 0x400, scoped, tag = 'output window, operand 0, single buffered']
    #allocation3 [shape = 's32[1]{0}', space=sflag, size = 0x4, scoped, tag = 'scoped memory for tpu_custom_call.1']
    %12 = vsyncpa [#allocation3], 0
    // Predicated region
    $region2: #{tpu_custom_call.1} parent=1 // pred_check
      _
    $region3: #{tpu_custom_call.1} parent=1 // pred_check_branch
      %14 = sbr.rel (0) target = $region5
    $region4: #{tpu_custom_call.1} parent=1 // pred_region
      _
    $region5: #{tpu_custom_call.1} parent=1 // pred_fallthru
      _
    // Predicated region
    $region6: #{tpu_custom_call.1} parent=1 // pred_check
      _
    $region7: #{tpu_custom_call.1} parent=1 // pred_check_branch
      %16 = sbr.rel (0) target = $region9
    $region8: #{tpu_custom_call.1} parent=1 // pred_region
      _
    $region9: #{tpu_custom_call.1} parent=1 // pred_fallthru
      _
    // Predicated region
    $region10: #{tpu_custom_call.1} parent=1 // pred_check
      _
    $region11: #{tpu_custom_call.1} parent=1 // pred_check_branch
      %18 = sbr.rel (0) target = $region13
    $region12: #{tpu_custom_call.1} parent=1 // pred_region
      _
    $region13: #{tpu_custom_call.1} parent=1 // pred_fallthru
      _
    // Predicated region
    $region14: #{tpu_custom_call.1} parent=1 // pred_check
      _
    $region15: #{tpu_custom_call.1} parent=1 // pred_check_branch
      %20 = sbr.rel (0) target = $region17
    $region16: #{tpu_custom_call.1} parent=1 // pred_region
      _
    $region17: #{tpu_custom_call.1} parent=1 // pred_fallthru
      _
    // Predicated region
    $region18: #{tpu_custom_call.1} parent=1 // pred_check
      _
    $region19: #{tpu_custom_call.1} parent=1 // pred_check_branch
      %22 = sbr.rel (0) target = $region21
    $region20: #{tpu_custom_call.1} parent=1 // pred_region
      _
    $region21: #{tpu_custom_call.1} parent=1 // pred_fallthru
      _
    // Predicated region
    $region22: #{tpu_custom_call.1} parent=1 // pred_check
      _
    $region23: #{tpu_custom_call.1} parent=1 // pred_check_branch
      %24 = sbr.rel (0) target = $region25
    $region24: #{tpu_custom_call.1} parent=1 // pred_region
      _
    $region25: #{tpu_custom_call.1} parent=1 // pred_fallthru
      _
    // Predicated region
    $region26: #{tpu_custom_call.1} parent=1 // pred_check
      _
    $region27: #{tpu_custom_call.1} parent=1 // pred_check_branch
      %26 = sbr.rel (0) target = $region29
    $region28: #{tpu_custom_call.1} parent=1 // pred_region
      _
    $region29: #{tpu_custom_call.1} parent=1 // pred_fallthru
      _
    %v27 = vld [vmem:[%s1] sm:$0xff]
    %v28 = vld [vmem:[%s1 + $0x8] sm:$0xff]
    %v29 = vld [vmem:[%s0] sm:$0x3]
    %v30 = vld [vmem:[%s2] sm:$0xff]
    %v31 = vld [vmem:[%s2 + $0x8] sm:$0xff]
    %33 = vset.pattern.permute.xlu0 0
    %34 = vperm.xlu0 %33, %v30
    %v35 = vpop.permute.xlu0 %34
    %38 = vset.pattern.permute.xlu0 0
    %39 = vperm.xlu0 %38, %v31
    %v40 = vpop.permute.xlu0 %39
    %vm42 = vcmask 130048
    %v44 = vsel %vm42, %v27, 0
    %v47 = vsel %vm42, %v28, 0
    %v50 = vsel %vm42, %v29, 0
    %52 = vmatpush.xpose.msra.mxu0 0.0
    %53 = vmatpush.xpose.msra.mxu0 0.0
    %54 = vmatpush.xpose.msra.mxu0 0.0
    %55 = vmatpush.xpose.msra.mxu0 0.0
    %56 = vmatpush.xpose.msra.mxu0 0.0
    %57 = vmatpush.xpose.msra.mxu0 0.0
    %58 = vmatpush.xpose.msra.mxu0 0.0
    %59 = vmatpush.xpose.msra.mxu0 0.0
    %60 = vmatpush.xpose.msra.mxu0 0.0
    %61 = vmatpush.xpose.msra.mxu0 0.0
    %62 = vmatpush.xpose.msra.mxu0 0.0
    %63 = vmatpush.xpose.msra.mxu0 0.0
    %64 = vmatpush.xpose.msra.mxu0 0.0
    %65 = vmatpush.xpose.msra.mxu0 0.0
    %66 = vmatpush.xpose.msra.mxu0 0.0
    %67 = vmatpush.xpose.msra.mxu0 %v50
    %68 = vmatmul.f32.gmra.mxu0 %v44
    %v69 = vpop.f32.mrf.mxu0
    %v70 = vadd.f32 %v35, %v69
    %71 = vmatmul.f32.gmra.mxu0 %v47
    %v72 = vpop.f32.mrf.mxu0
    %v73 = vadd.f32 %v40, %v72
    %74 = vdwg.mxu0
    %v75 = vmul.f32 %v70, 0.1
    %v76 = vmul.f32 %v73, 0.1
    %v77 = vmax.f32 %v70, %v75
    %v78 = vmax.f32 %v73, %v76
    %v79 = vld [vmem:[%s3] sm:$0xff]
    %v80 = vld [vmem:[%s4] sm:$0xff]
    %82 = vset.pattern.permute.xlu0 0
    %83 = vperm.xlu0 %82, %v80
    %v84 = vpop.permute.xlu0 %83
    %v87 = vsel %vm42, %v79, 0
    %89 = vmatpush.msra.mxu0 0.0
    %90 = vmatpush.msra.mxu0 0.0
    %91 = vmatpush.msra.mxu0 0.0
    %92 = vmatpush.msra.mxu0 0.0
    %93 = vmatpush.msra.mxu0 0.0
    %94 = vmatpush.msra.mxu0 0.0
    %95 = vmatpush.msra.mxu0 0.0
    %96 = vmatpush.msra.mxu0 0.0
    %97 = vmatpush.msra.mxu0 0.0
    %98 = vmatpush.msra.mxu0 0.0
    %99 = vmatpush.msra.mxu0 0.0
    %100 = vmatpush.msra.mxu0 0.0
    %101 = vmatpush.msra.mxu0 0.0
    %102 = vmatpush.msra.mxu0 0.0
    %103 = vmatpush.msra.mxu0 %v78
    %104 = vmatpush.msra.mxu0 %v77
    %105 = vmatmul.f32.gmra.mxu0 %v87
    %v106 = vpop.f32.mrf.mxu0
    %v107 = vadd.f32 %v84, %v106
    %108 = vdwg.mxu0
    %v109 = vmul.f32 %v107, 0.1
    %v110 = vmax.f32 %v107, %v109
    %v111 = vld [vmem:[%s5] sm:$0x3]
    %v112 = vld [vmem:[%s6] sm:$0x3]
    %114 = vset.pattern.permute.xlu0 0
    %115 = vperm.xlu0 %114, %v112
    %v116 = vpop.permute.xlu0 %115
    %vm118 = vcmask 64512
    %v120 = vsel %vm118, %v111, 0
    %122 = vmatpush.msra.mxu0 0.0
    %123 = vmatpush.msra.mxu0 0.0
    %124 = vmatpush.msra.mxu0 0.0
    %125 = vmatpush.msra.mxu0 0.0
    %126 = vmatpush.msra.mxu0 0.0
    %127 = vmatpush.msra.mxu0 0.0
    %128 = vmatpush.msra.mxu0 0.0
    %129 = vmatpush.msra.mxu0 0.0
    %130 = vmatpush.msra.mxu0 0.0
    %131 = vmatpush.msra.mxu0 0.0
    %132 = vmatpush.msra.mxu0 0.0
    %133 = vmatpush.msra.mxu0 0.0
    %134 = vmatpush.msra.mxu0 0.0
    %135 = vmatpush.msra.mxu0 0.0
    %136 = vmatpush.msra.mxu0 0.0
    %137 = vmatpush.msra.mxu0 %v110
    %138 = vmatmul.f32.gmra.mxu0 %v120
    %v139 = vpop.f32.mrf.mxu0
    %v140 = vadd.f32 %v116, %v139
    %141 = vdwg.mxu0
    %vm142 = vcmask 9216
    %143 = vst.msk [vmem:[#allocation2] sm:$0x3] %vm142, %v140
    // Predicated region
    $region30: #{tpu_custom_call.1} parent=1 // pred_check
      _
    $region31: #{tpu_custom_call.1} parent=1 // pred_check_branch
      %145 = sbr.rel (0) target = $region33
    $region32: #{tpu_custom_call.1} parent=1 // pred_region
      %147 = vsyncadd [#allocation3], 0
      %s149 = sshll.u32 [#allocation2], 4
      %s150 = int_to_ptr.vmem [resolvable:$true] %s149
      %s151 = sshll.u32 %s7, 4
      %s152 = int_to_ptr.hbm [resolvable:$true] %s151
      %154 = dma.vmem_to_hbm [thread:$0]  %s150, 32, %s152, [#allocation3]
    $region33: #{tpu_custom_call.1} parent=1 // pred_fallthru
      _
    // Predicated region
    $region34: #{tpu_custom_call.1} parent=1 // pred_check
      _
    $region35: #{tpu_custom_call.1} parent=1 // pred_check_branch
      %156 = sbr.rel (0) target = $region37
    $region36: #{tpu_custom_call.1} parent=1 // pred_region
      %158 = dma.done [#allocation3], 32
    $region37: #{tpu_custom_call.1} parent=1 // pred_fallthru
      _
    %159 = vsyncpa [#allocation3], 1

</llo_original>
